<compile_context>
chip_gen: v5e
topology: v5e:2x2
jax: 0.10.0
libtpu: 0.0.40
codegen_flags: <defaults>
</compile_context>

<pallas_src>
import jax
import jax.numpy as jnp
from jax.experimental import pallas as pl
from jax.experimental.pallas import tpu as pltpu


# ----------------------------------------------------------------------------
# Sizing helpers (padding-aware, generation-aware)
# ----------------------------------------------------------------------------

def _round_up(x, m):
    return ((x + m - 1) // m) * m


def _per_buffer_budget_bytes():
    """Actual-VMEM budget for ONE pipeline buffer.

    There are ~4 live buffers (in + out, each double-buffered); 2 MiB each
    keeps the total around 8 MiB, comfortably under the default scoped-VMEM
    limit on v5e (16 MiB), v6e/v7x (32 MiB) and v7x's 64 MiB physical VMEM."""
    try:
        cap = pltpu.get_tpu_info().vmem_capacity_bytes
    except Exception:  # pragma: no cover - conservative default
        cap = 64 << 20
    return int(max(256 << 10, min(2 << 20, cap // 32)))


def _pick_gb(rows, per_row_padded_bytes, multiple, min_steps=2):
    """Rows per block: biggest slab that fits the per-buffer budget, kept a
    multiple of `multiple` (the (8,128) second-minor constraint for 2-D
    blocks), with >= min_steps grid steps when the problem is big enough so
    the 'parallel' leading axis can be split across v7x TensorCores."""
    budget = _per_buffer_budget_bytes()
    gb = max(1, budget // max(per_row_padded_bytes, 1))
    if gb * min_steps > rows and rows >= min_steps * multiple:
        gb = pl.cdiv(rows, min_steps)
    if gb >= rows:
        return rows
    # Note: for pathologically huge H*W this can exceed the budget by design
    # (a single block of `multiple` rows); fine for any realistic CNN shape.
    gb = max(gb, multiple)
    gb = (gb // multiple) * multiple
    return min(gb, rows)


# ----------------------------------------------------------------------------
# Primary path: lane-dense (gb, H*W) -> (gb, W*H) blocks
# ----------------------------------------------------------------------------

def _flat5_lane_dense(x2, rows, H, W, gb):
    HW = H * W

    def kernel(x_ref, o_ref):
        b = x_ref.shape[0]  # static block row count
        x = x_ref[...].reshape(b, H, W)
        o_ref[...] = jnp.swapaxes(x, 1, 2).reshape(b, W * H)

    return pl.pallas_call(
        kernel,
        out_shape=jax.ShapeDtypeStruct((rows, W * H), x2.dtype),
        grid=(pl.cdiv(rows, gb),),
        in_specs=[pl.BlockSpec((gb, HW), lambda i: (i, 0))],
        out_specs=pl.BlockSpec((gb, W * H), lambda i: (i, 0)),
        compiler_params=pltpu.CompilerParams(
            dimension_semantics=("parallel",)
        ),
    )(x2)


# ----------------------------------------------------------------------------
# Fallback path: proven (gb, H, W) -> (gb, W, H) blocks (lane-sparse stores,
# but guaranteed to lower), padding-aware sizing.
# ----------------------------------------------------------------------------

def _flat5_3d(x3, rows, H, W, gb):
    def kernel(x_ref, o_ref):
        o_ref[...] = jnp.swapaxes(x_ref[...], 1, 2)

    return pl.pallas_call(
        kernel,
        out_shape=jax.ShapeDtypeStruct((rows, W, H), x3.dtype),
        grid=(pl.cdiv(rows, gb),),
        in_specs=[pl.BlockSpec((gb, H, W), lambda i: (i, 0, 0))],
        out_specs=pl.BlockSpec((gb, W, H), lambda i: (i, 0, 0)),
        compiler_params=pltpu.CompilerParams(
            dimension_semantics=("parallel",)
        ),
    )(x3)


_LANE_DENSE_FAILED = False  # set once if the lane-dense lowering is rejected


def alexnet_flat5(x):
    """Equivalent of torch.flatten(torch.transpose(x, 2, 3), start_dim=1)."""
    global _LANE_DENSE_FAILED
    N, C, H, W = x.shape
    rows = N * C
    itemsize = x.dtype.itemsize

    if not _LANE_DENSE_FAILED:
        # Lane-dense blocks: per-row padded cost = round_up(H*W, 128) words.
        per_row = max(_round_up(H * W, 128), _round_up(W * H, 128)) * itemsize
        gb = _pick_gb(rows, per_row, multiple=8)
        try:
            x2 = x.reshape(rows, H * W)          # free row-major reshape
            y = _flat5_lane_dense(x2, rows, H, W, gb)
            y = jax.block_until_ready(y)         # force compile+run here so a
            return y.reshape(N, C * W * H)       # lowering failure is caught
        except Exception:
            # In-kernel fold of small minor dims into lanes didn't lower on
            # this toolchain/generation: use the proven 3-D path instead.
            _LANE_DENSE_FAILED = True

    # (8,128)-padded per-row footprint of the 3-D blocks (max of in/out).
    per_row = max(
        _round_up(H, 8) * _round_up(W, 128),
        _round_up(W, 8) * _round_up(H, 128),
    ) * itemsize
    gb = _pick_gb(rows, per_row, multiple=1)
    x3 = x.reshape(rows, H, W)                   # free row-major reshape
    y = _flat5_3d(x3, rows, H, W, gb)
    # flatten(start_dim=1): (N*C, W, H) -> (N, C*W*H); row-major, zero-copy.
    return y.reshape(N, C * W * H)


if __name__ == "__main__":
    key = jax.random.PRNGKey(0)
    x = jax.random.normal(key, (2, 4, 16, 16), dtype=jnp.float32)

    out = jax.block_until_ready(alexnet_flat5(x))

    # Reference semantics check (pure JAX mirror of the torch ops).
    ref = jnp.swapaxes(x, 2, 3).reshape(x.shape[0], -1)
    assert out.shape == (2, 4 * 16 * 16), out.shape
    assert out.dtype == x.dtype
    assert jnp.allclose(out, ref)

    # Rectangular spatial dims (H != W) so a swapped-axis regression cannot
    # hide behind square shapes.
    x2 = jax.random.normal(jax.random.PRNGKey(0), (2, 3, 16, 8), dtype=jnp.float32)
    out2 = jax.block_until_ready(alexnet_flat5(x2))
    ref2 = jnp.swapaxes(x2, 2, 3).reshape(x2.shape[0], -1)
    assert out2.shape == (2, 3 * 8 * 16), out2.shape
    assert jnp.allclose(out2, ref2)

    print("KERNEL_OK")
</pallas_src>

<mosaic_0001>
module attributes {stable_mosaic.version = 11 : i64} {
  func.func @kernel(%arg0: i32, %arg1: memref<8x256xf32, #tpu.memory_space<vmem>>, %arg2: memref<8x256xf32, #tpu.memory_space<vmem>>) attributes {dimension_semantics = [#tpu.dimension_semantics<parallel>], iteration_bounds = array<i64: 1>, scalar_prefetch = 0 : i64, scratch_operands = 0 : i64, tpu.core_type = #tpu.core_type<tc>, window_params = [{transform_indices = @transform_0, window_bounds = array<i64: 8, 256>}, {transform_indices = @transform_1, window_bounds = array<i64: 8, 256>}]} {
    %c0 = arith.constant 0 : index
    %c0_0 = arith.constant 0 : index
    %0 = vector.load %arg1[%c0, %c0_0] : memref<8x256xf32, #tpu.memory_space<vmem>>, vector<8x256xf32>
    %1 = vector.shape_cast %0 : vector<8x256xf32> to vector<8x16x16xf32>
    %2 = tpu.transpose %1, [0, 2, 1] : vector<8x16x16xf32> -> vector<8x16x16xf32>
    %3 = vector.shape_cast %2 : vector<8x16x16xf32> to vector<8x256xf32>
    %c0_1 = arith.constant 0 : index
    %c0_2 = arith.constant 0 : index
    %4 = vector.load %arg2[%c0_1, %c0_2] : memref<8x256xf32, #tpu.memory_space<vmem>>, vector<8x256xf32>
    tpu.vector_store %arg2[%c0_1, %c0_2], %3 {strides = array<i32>} : memref<8x256xf32, #tpu.memory_space<vmem>>, vector<8x256xf32>,
    return
  }
  func.func @transform_0(%arg0: i32) -> (i32, i32) {
    %c0_i32 = arith.constant 0 : i32
    %c0_i32_0 = arith.constant 0 : i32
    return %arg0, %c0_i32 : i32, i32
  }
  func.func @transform_1(%arg0: i32) -> (i32, i32) {
    %c0_i32 = arith.constant 0 : i32
    %c0_i32_0 = arith.constant 0 : i32
    return %arg0, %c0_i32 : i32, i32
  }
}

module attributes {stable_mosaic.version = 11 : i64} {
  func.func @kernel(%arg0: i32, %arg1: memref<4x16x16xf32, #tpu.memory_space<vmem>>, %arg2: memref<4x16x16xf32, #tpu.memory_space<vmem>>) attributes {dimension_semantics = [#tpu.dimension_semantics<parallel>], iteration_bounds = array<i64: 2>, scalar_prefetch = 0 : i64, scratch_operands = 0 : i64, tpu.core_type = #tpu.core_type<tc>, window_params = [{transform_indices = @transform_0, window_bounds = array<i64: 4, 16, 16>}, {transform_indices = @transform_1, window_bounds = array<i64: 4, 16, 16>}]} {
    %c0 = arith.constant 0 : index
    %c0_0 = arith.constant 0 : index
    %c0_1 = arith.constant 0 : index
    %0 = vector.load %arg1[%c0, %c0_0, %c0_1] : memref<4x16x16xf32, #tpu.memory_space<vmem>>, vector<4x16x16xf32>
    %1 = tpu.transpose %0, [0, 2, 1] : vector<4x16x16xf32> -> vector<4x16x16xf32>
    %c0_2 = arith.constant 0 : index
    %c0_3 = arith.constant 0 : index
    %c0_4 = arith.constant 0 : index
    %2 = vector.load %arg2[%c0_2, %c0_3, %c0_4] : memref<4x16x16xf32, #tpu.memory_space<vmem>>, vector<4x16x16xf32>
    tpu.vector_store %arg2[%c0_2, %c0_3, %c0_4], %1 {strides = array<i32>} : memref<4x16x16xf32, #tpu.memory_space<vmem>>, vector<4x16x16xf32>,
    return
  }
  func.func @transform_0(%arg0: i32) -> (i32, i32, i32) {
    %c0_i32 = arith.constant 0 : i32
    %c0_i32_0 = arith.constant 0 : i32
    %c0_i32_1 = arith.constant 0 : i32
    return %arg0, %c0_i32, %c0_i32_0 : i32, i32, i32
  }
  func.func @transform_1(%arg0: i32) -> (i32, i32, i32) {
    %c0_i32 = arith.constant 0 : i32
    %c0_i32_0 = arith.constant 0 : i32
    %c0_i32_1 = arith.constant 0 : i32
    return %arg0, %c0_i32, %c0_i32_0 : i32, i32, i32
  }
}

</mosaic_0001>

<llo_original>
// kernel: tpu_custom_call.1
$region0: #{tpu_custom_call.1}
  #allocation0 [shape = 'u32[]', space=smem, size = 0x4, offset = 0x4, fixed_abs, tag = 'smem constant byte address 0x4 - core index']
  #allocation1 [shape = 'u32[72,128]{1,0:T(1,128)}', space=vmem, size = 0x9000, scoped, tag = 'internal scratch']
  %s0 = inlined_call_operand.hbm [shape: f32[8,256], index: 0, kind: input, shape index: {}]
  %s1 = inlined_call_operand.hbm [shape: f32[8,256], index: 1, kind: output, shape index: {}]
  %s2 = sld [smem:[#allocation0]]
  $region18: #{tpu_custom_call.1} parent=0
    _
  %s4 = ssub.s32 1, %s2
  %s5 = scalar_select 0, %s4, %s2
  $region1: #{tpu_custom_call.1} parent=0
    #allocation2 [shape = 'u8[8192]{0}', space=vmem, size = 0x2000, scoped, tag = 'input window, operand 0, single buffered']
    #allocation3 [shape = 's32[1]{0}', space=sflag, size = 0x4, scoped, tag = 'scoped memory for tpu_custom_call.1']
    #allocation4 [shape = 's32[1]{0}', space=sflag, size = 0x4, scoped, tag = 'scoped memory for tpu_custom_call.1']
    #allocation5 [shape = 'u8[8192]{0}', space=vmem, size = 0x2000, scoped, tag = 'output window, operand 0, single buffered']
    %6 = vsyncpa [#allocation3], 0
    %7 = vsyncpa [#allocation4], 0
    // Predicated region
    $region2: #{tpu_custom_call.1} parent=1 // pred_check
      _
    $region3: #{tpu_custom_call.1} parent=1 // pred_check_branch
      %9 = sbr.rel (0) target = $region5
    $region4: #{tpu_custom_call.1} parent=1 // pred_region
      %11 = vsyncadd [#allocation3], 0
      %s13 = sshll.u32 %s0, 4
      %s14 = int_to_ptr.hbm [resolvable:$true] %s13
      %s15 = sshll.u32 [#allocation2], 4
      %s16 = int_to_ptr.vmem [resolvable:$true] %s15
      %18 = dma.hbm_to_vmem [thread:$0]  %s14, 256, %s16, [#allocation3]
    $region5: #{tpu_custom_call.1} parent=1 // pred_fallthru
      _
    // Predicated region
    $region6: #{tpu_custom_call.1} parent=1 // pred_check
      _
    $region7: #{tpu_custom_call.1} parent=1 // pred_check_branch
      %20 = sbr.rel (0) target = $region9
    $region8: #{tpu_custom_call.1} parent=1 // pred_region
      %22 = dma.done [#allocation3], 256
    $region9: #{tpu_custom_call.1} parent=1 // pred_fallthru
      _
    %v23 = vld [vmem:[#allocation2] sm:$0xff]
    %v24 = vld [vmem:[#allocation2 + $0x8] sm:$0xff]
    %26 = vrot.lane.b32.xlu0 %v23, 112
    %v27 = vpop.permute.xlu0 %26
    %29 = vrot.lane.b32.xlu0 %v23, 96
    %v30 = vpop.permute.xlu0 %29
    %32 = vrot.lane.b32.xlu0 %v23, 80
    %v33 = vpop.permute.xlu0 %32
    %35 = vrot.lane.b32.xlu0 %v23, 64
    %v36 = vpop.permute.xlu0 %35
    %38 = vrot.lane.b32.xlu0 %v23, 48
    %v39 = vpop.permute.xlu0 %38
    %41 = vrot.lane.b32.xlu0 %v23, 32
    %v42 = vpop.permute.xlu0 %41
    %44 = vrot.lane.b32.xlu0 %v23, 16
    %v45 = vpop.permute.xlu0 %44
    %48 = vrot.lane.b32.xlu0 %v24, 112
    %v49 = vpop.permute.xlu0 %48
    %51 = vrot.lane.b32.xlu0 %v24, 96
    %v52 = vpop.permute.xlu0 %51
    %54 = vrot.lane.b32.xlu0 %v24, 80
    %v55 = vpop.permute.xlu0 %54
    %57 = vrot.lane.b32.xlu0 %v24, 64
    %v58 = vpop.permute.xlu0 %57
    %60 = vrot.lane.b32.xlu0 %v24, 48
    %v61 = vpop.permute.xlu0 %60
    %63 = vrot.lane.b32.xlu0 %v24, 32
    %v64 = vpop.permute.xlu0 %63
    %66 = vrot.lane.b32.xlu0 %v24, 16
    %v67 = vpop.permute.xlu0 %66
    %v69 = vrot.slane %v30, 4
    %vm70 = vcmask 1047556
    %v71 = vsel %vm70, %v69, %v23
    %v72 = vrot.slane %v23, 4
    %v73 = vsel %vm70, %v30, %v72
    %v75 = vunpack.c.l.s4 1983009808
    %v76 = vunpack.c.0.s8 %v75
    %v77 = vperm.slane %v71, %v76
    %v79 = vunpack.c.l.s4 1983009808
    %v80 = vunpack.c.0.s8 %v79
    %v81 = vperm.slane %v73, %v80
    %v82 = vrot.slane %v33, 4
    %v83 = vsel %vm70, %v82, %v27
    %v84 = vrot.slane %v27, 4
    %v85 = vsel %vm70, %v33, %v84
    %v87 = vunpack.c.l.s4 1983009808
    %v88 = vunpack.c.0.s8 %v87
    %v89 = vperm.slane %v83, %v88
    %v91 = vunpack.c.l.s4 1983009808
    %v92 = vunpack.c.0.s8 %v91
    %v93 = vperm.slane %v85, %v92
    %v94 = vrot.slane %v42, 4
    %v95 = vsel %vm70, %v94, %v36
    %v96 = vrot.slane %v36, 4
    %v97 = vsel %vm70, %v42, %v96
    %v99 = vunpack.c.l.s4 1983009808
    %v100 = vunpack.c.0.s8 %v99
    %v101 = vperm.slane %v95, %v100
    %v103 = vunpack.c.l.s4 1983009808
    %v104 = vunpack.c.0.s8 %v103
    %v105 = vperm.slane %v97, %v104
    %v106 = vrot.slane %v45, 4
    %v107 = vsel %vm70, %v106, %v39
    %v108 = vrot.slane %v39, 4
    %v109 = vsel %vm70, %v45, %v108
    %v111 = vunpack.c.l.s4 1983009808
    %v112 = vunpack.c.0.s8 %v111
    %v113 = vperm.slane %v107, %v112
    %v115 = vunpack.c.l.s4 1983009808
    %v116 = vunpack.c.0.s8 %v115
    %v117 = vperm.slane %v109, %v116
    %v118 = vrot.slane %v89, 4
    %v119 = vsel %vm70, %v118, %v77
    %v120 = vrot.slane %v77, 4
    %v121 = vsel %vm70, %v89, %v120
    %v123 = vunpack.c.l.s4 1934713408
    %v124 = vunpack.c.0.s8 %v123
    %v125 = vperm.slane %v119, %v124
    %v127 = vunpack.c.l.s4 1934713408
    %v128 = vunpack.c.0.s8 %v127
    %v129 = vperm.slane %v121, %v128
    %v130 = vrot.slane %v93, 4
    %v131 = vsel %vm70, %v130, %v81
    %v132 = vrot.slane %v81, 4
    %v133 = vsel %vm70, %v93, %v132
    %v135 = vunpack.c.l.s4 1934713408
    %v136 = vunpack.c.0.s8 %v135
    %v137 = vperm.slane %v131, %v136
    %v139 = vunpack.c.l.s4 1934713408
    %v140 = vunpack.c.0.s8 %v139
    %v141 = vperm.slane %v133, %v140
    %v142 = vrot.slane %v113, 4
    %v143 = vsel %vm70, %v142, %v101
    %v144 = vrot.slane %v101, 4
    %v145 = vsel %vm70, %v113, %v144
    %v147 = vunpack.c.l.s4 1934713408
    %v148 = vunpack.c.0.s8 %v147
    %v149 = vperm.slane %v143, %v148
    %v151 = vunpack.c.l.s4 1934713408
    %v152 = vunpack.c.0.s8 %v151
    %v153 = vperm.slane %v145, %v152
    %v154 = vrot.slane %v117, 4
    %v155 = vsel %vm70, %v154, %v105
    %v156 = vrot.slane %v105, 4
    %v157 = vsel %vm70, %v117, %v156
    %v159 = vunpack.c.l.s4 1934713408
    %v160 = vunpack.c.0.s8 %v159
    %v161 = vperm.slane %v155, %v160
    %v163 = vunpack.c.l.s4 1934713408
    %v164 = vunpack.c.0.s8 %v163
    %v165 = vperm.slane %v157, %v164
    %v166 = vrot.slane %v149, 4
    %v167 = vsel %vm70, %v166, %v125
    %v168 = vrot.slane %v125, 4
    %v169 = vsel %vm70, %v149, %v168
    %v170 = vrot.slane %v153, 4
    %v171 = vsel %vm70, %v170, %v129
    %v172 = vrot.slane %v129, 4
    %v173 = vsel %vm70, %v153, %v172
    %v174 = vrot.slane %v161, 4
    %v175 = vsel %vm70, %v174, %v137
    %v176 = vrot.slane %v137, 4
    %v177 = vsel %vm70, %v161, %v176
    %v178 = vrot.slane %v165, 4
    %v179 = vsel %vm70, %v178, %v141
    %v180 = vrot.slane %v141, 4
    %v181 = vsel %vm70, %v165, %v180
    %v182 = vrot.slane %v52, 4
    %v183 = vsel %vm70, %v182, %v24
    %v184 = vrot.slane %v24, 4
    %v185 = vsel %vm70, %v52, %v184
    %v187 = vunpack.c.l.s4 1983009808
    %v188 = vunpack.c.0.s8 %v187
    %v189 = vperm.slane %v183, %v188
    %v191 = vunpack.c.l.s4 1983009808
    %v192 = vunpack.c.0.s8 %v191
    %v193 = vperm.slane %v185, %v192
    %v194 = vrot.slane %v55, 4
    %v195 = vsel %vm70, %v194, %v49
    %v196 = vrot.slane %v49, 4
    %v197 = vsel %vm70, %v55, %v196
    %v199 = vunpack.c.l.s4 1983009808
    %v200 = vunpack.c.0.s8 %v199
    %v201 = vperm.slane %v195, %v200
    %v203 = vunpack.c.l.s4 1983009808
    %v204 = vunpack.c.0.s8 %v203
    %v205 = vperm.slane %v197, %v204
    %v206 = vrot.slane %v64, 4
    %v207 = vsel %vm70, %v206, %v58
    %v208 = vrot.slane %v58, 4
    %v209 = vsel %vm70, %v64, %v208
    %v211 = vunpack.c.l.s4 1983009808
    %v212 = vunpack.c.0.s8 %v211
    %v213 = vperm.slane %v207, %v212
    %v215 = vunpack.c.l.s4 1983009808
    %v216 = vunpack.c.0.s8 %v215
    %v217 = vperm.slane %v209, %v216
    %v218 = vrot.slane %v67, 4
    %v219 = vsel %vm70, %v218, %v61
    %v220 = vrot.slane %v61, 4
    %v221 = vsel %vm70, %v67, %v220
    %v223 = vunpack.c.l.s4 1983009808
    %v224 = vunpack.c.0.s8 %v223
    %v225 = vperm.slane %v219, %v224
    %v227 = vunpack.c.l.s4 1983009808
    %v228 = vunpack.c.0.s8 %v227
    %v229 = vperm.slane %v221, %v228
    %v230 = vrot.slane %v201, 4
    %v231 = vsel %vm70, %v230, %v189
    %v232 = vrot.slane %v189, 4
    %v233 = vsel %vm70, %v201, %v232
    %v235 = vunpack.c.l.s4 1934713408
    %v236 = vunpack.c.0.s8 %v235
    %v237 = vperm.slane %v231, %v236
    %v239 = vunpack.c.l.s4 1934713408
    %v240 = vunpack.c.0.s8 %v239
    %v241 = vperm.slane %v233, %v240
    %v242 = vrot.slane %v205, 4
    %v243 = vsel %vm70, %v242, %v193
    %v244 = vrot.slane %v193, 4
    %v245 = vsel %vm70, %v205, %v244
    %v247 = vunpack.c.l.s4 1934713408
    %v248 = vunpack.c.0.s8 %v247
    %v249 = vperm.slane %v243, %v248
    %v251 = vunpack.c.l.s4 1934713408
    %v252 = vunpack.c.0.s8 %v251
    %v253 = vperm.slane %v245, %v252
    %v254 = vrot.slane %v225, 4
    %v255 = vsel %vm70, %v254, %v213
    %v256 = vrot.slane %v213, 4
    %v257 = vsel %vm70, %v225, %v256
    %v259 = vunpack.c.l.s4 1934713408
    %v260 = vunpack.c.0.s8 %v259
    %v261 = vperm.slane %v255, %v260
    %v263 = vunpack.c.l.s4 1934713408
    %v264 = vunpack.c.0.s8 %v263
    %v265 = vperm.slane %v257, %v264
    %v266 = vrot.slane %v229, 4
    %v267 = vsel %vm70, %v266, %v217
    %v268 = vrot.slane %v217, 4
    %v269 = vsel %vm70, %v229, %v268
    %v271 = vunpack.c.l.s4 1934713408
    %v272 = vunpack.c.0.s8 %v271
    %v273 = vperm.slane %v267, %v272
    %v275 = vunpack.c.l.s4 1934713408
    %v276 = vunpack.c.0.s8 %v275
    %v277 = vperm.slane %v269, %v276
    %v278 = vrot.slane %v261, 4
    %v279 = vsel %vm70, %v278, %v237
    %v280 = vrot.slane %v237, 4
    %v281 = vsel %vm70, %v261, %v280
    %v282 = vrot.slane %v265, 4
    %v283 = vsel %vm70, %v282, %v241
    %v284 = vrot.slane %v241, 4
    %v285 = vsel %vm70, %v265, %v284
    %v286 = vrot.slane %v273, 4
    %v287 = vsel %vm70, %v286, %v249
    %v288 = vrot.slane %v249, 4
    %v289 = vsel %vm70, %v273, %v288
    %v290 = vrot.slane %v277, 4
    %v291 = vsel %vm70, %v290, %v253
    %v292 = vrot.slane %v253, 4
    %v293 = vsel %vm70, %v277, %v292
    %294 = vxpose.xlu0.b32.start [1/16] %v167, 128
    %295 = vxpose.xlu0.b32.cont [2/16] %v279, 128
    %296 = vxpose.xlu0.b32.cont [3/16] 0.0, 128
    %297 = vxpose.xlu0.b32.cont [4/16] 0.0, 128
    %298 = vxpose.xlu0.b32.cont [5/16] 0.0, 128
    %299 = vxpose.xlu0.b32.cont [6/16] 0.0, 128
    %300 = vxpose.xlu0.b32.cont [7/16] 0.0, 128
    %301 = vxpose.xlu0.b32.cont [8/16] 0.0, 128
    %302 = vxpose.xlu0.b32.cont [9/16] 0.0, 128
    %303 = vxpose.xlu0.b32.cont [10/16] 0.0, 128
    %304 = vxpose.xlu0.b32.cont [11/16] 0.0, 128
    %305 = vxpose.xlu0.b32.cont [12/16] 0.0, 128
    %306 = vxpose.xlu0.b32.cont [13/16] 0.0, 128
    %307 = vxpose.xlu0.b32.cont [14/16] 0.0, 128
    %308 = vxpose.xlu0.b32.cont [15/16] 0.0, 128
    %309 = vxpose.xlu0.b32.end [16/16] 0.0, 128
    %v310 = vpop.trf.xlu0
    %v311 = vpop.trf.xlu0
    %v312 = vpop.trf.xlu0
    %v313 = vpop.trf.xlu0
    %v314 = vpop.trf.xlu0
    %v315 = vpop.trf.xlu0
    %v316 = vpop.trf.xlu0
    %v317 = vpop.trf.xlu0
    %v318 = vpop.trf.xlu0
    %v319 = vpop.trf.xlu0
    %v320 = vpop.trf.xlu0
    %v321 = vpop.trf.xlu0
    %v322 = vpop.trf.xlu0
    %v323 = vpop.trf.xlu0
    %v324 = vpop.trf.xlu0
    %v325 = vpop.trf.xlu0
    %326 = vxpose.xlu0.b32.start [1/16] %v169, 128
    %327 = vxpose.xlu0.b32.cont [2/16] %v281, 128
    %328 = vxpose.xlu0.b32.cont [3/16] 0.0, 128
    %329 = vxpose.xlu0.b32.cont [4/16] 0.0, 128
    %330 = vxpose.xlu0.b32.cont [5/16] 0.0, 128
    %331 = vxpose.xlu0.b32.cont [6/16] 0.0, 128
    %332 = vxpose.xlu0.b32.cont [7/16] 0.0, 128
    %333 = vxpose.xlu0.b32.cont [8/16] 0.0, 128
    %334 = vxpose.xlu0.b32.cont [9/16] 0.0, 128
    %335 = vxpose.xlu0.b32.cont [10/16] 0.0, 128
    %336 = vxpose.xlu0.b32.cont [11/16] 0.0, 128
    %337 = vxpose.xlu0.b32.cont [12/16] 0.0, 128
    %338 = vxpose.xlu0.b32.cont [13/16] 0.0, 128
    %339 = vxpose.xlu0.b32.cont [14/16] 0.0, 128
    %340 = vxpose.xlu0.b32.cont [15/16] 0.0, 128
    %341 = vxpose.xlu0.b32.end [16/16] 0.0, 128
    %v342 = vpop.trf.xlu0
    %v343 = vpop.trf.xlu0
    %v344 = vpop.trf.xlu0
    %v345 = vpop.trf.xlu0
    %v346 = vpop.trf.xlu0
    %v347 = vpop.trf.xlu0
    %v348 = vpop.trf.xlu0
    %v349 = vpop.trf.xlu0
    %v350 = vpop.trf.xlu0
    %v351 = vpop.trf.xlu0
    %v352 = vpop.trf.xlu0
    %v353 = vpop.trf.xlu0
    %v354 = vpop.trf.xlu0
    %v355 = vpop.trf.xlu0
    %v356 = vpop.trf.xlu0
    %v357 = vpop.trf.xlu0
    %358 = vxpose.xlu0.b32.start [1/16] %v171, 128
    %359 = vxpose.xlu0.b32.cont [2/16] %v283, 128
    %360 = vxpose.xlu0.b32.cont [3/16] 0.0, 128
    %361 = vxpose.xlu0.b32.cont [4/16] 0.0, 128
    %362 = vxpose.xlu0.b32.cont [5/16] 0.0, 128
    %363 = vxpose.xlu0.b32.cont [6/16] 0.0, 128
    %364 = vxpose.xlu0.b32.cont [7/16] 0.0, 128
    %365 = vxpose.xlu0.b32.cont [8/16] 0.0, 128
    %366 = vxpose.xlu0.b32.cont [9/16] 0.0, 128
    %367 = vxpose.xlu0.b32.cont [10/16] 0.0, 128
    %368 = vxpose.xlu0.b32.cont [11/16] 0.0, 128
    %369 = vxpose.xlu0.b32.cont [12/16] 0.0, 128
    %370 = vxpose.xlu0.b32.cont [13/16] 0.0, 128
    %371 = vxpose.xlu0.b32.cont [14/16] 0.0, 128
    %372 = vxpose.xlu0.b32.cont [15/16] 0.0, 128
    %373 = vxpose.xlu0.b32.end [16/16] 0.0, 128
    %v374 = vpop.trf.xlu0
    %v375 = vpop.trf.xlu0
    %v376 = vpop.trf.xlu0
    %v377 = vpop.trf.xlu0
    %v378 = vpop.trf.xlu0
    %v379 = vpop.trf.xlu0
    %v380 = vpop.trf.xlu0
    %v381 = vpop.trf.xlu0
    %v382 = vpop.trf.xlu0
    %v383 = vpop.trf.xlu0
    %v384 = vpop.trf.xlu0
    %v385 = vpop.trf.xlu0
    %v386 = vpop.trf.xlu0
    %v387 = vpop.trf.xlu0
    %v388 = vpop.trf.xlu0
    %v389 = vpop.trf.xlu0
    %390 = vxpose.xlu0.b32.start [1/16] %v173, 128
    %391 = vxpose.xlu0.b32.cont [2/16] %v285, 128
    %392 = vxpose.xlu0.b32.cont [3/16] 0.0, 128
    %393 = vxpose.xlu0.b32.cont [4/16] 0.0, 128
    %394 = vxpose.xlu0.b32.cont [5/16] 0.0, 128
    %395 = vxpose.xlu0.b32.cont [6/16] 0.0, 128
    %396 = vxpose.xlu0.b32.cont [7/16] 0.0, 128
    %397 = vxpose.xlu0.b32.cont [8/16] 0.0, 128
    %398 = vxpose.xlu0.b32.cont [9/16] 0.0, 128
    %399 = vxpose.xlu0.b32.cont [10/16] 0.0, 128
    %400 = vxpose.xlu0.b32.cont [11/16] 0.0, 128
    %401 = vxpose.xlu0.b32.cont [12/16] 0.0, 128
    %402 = vxpose.xlu0.b32.cont [13/16] 0.0, 128
    %403 = vxpose.xlu0.b32.cont [14/16] 0.0, 128
    %404 = vxpose.xlu0.b32.cont [15/16] 0.0, 128
    %405 = vxpose.xlu0.b32.end [16/16] 0.0, 128
    %v406 = vpop.trf.xlu0
    %v407 = vpop.trf.xlu0
    %v408 = vpop.trf.xlu0
    %v409 = vpop.trf.xlu0
    %v410 = vpop.trf.xlu0
    %v411 = vpop.trf.xlu0
    %v412 = vpop.trf.xlu0
    %v413 = vpop.trf.xlu0
    %v414 = vpop.trf.xlu0
    %v415 = vpop.trf.xlu0
    %v416 = vpop.trf.xlu0
    %v417 = vpop.trf.xlu0
    %v418 = vpop.trf.xlu0
    %v419 = vpop.trf.xlu0
    %v420 = vpop.trf.xlu0
    %v421 = vpop.trf.xlu0
    %422 = vxpose.xlu0.b32.start [1/16] %v175, 128
    %423 = vxpose.xlu0.b32.cont [2/16] %v287, 128
    %424 = vxpose.xlu0.b32.cont [3/16] 0.0, 128
    %425 = vxpose.xlu0.b32.cont [4/16] 0.0, 128
    %426 = vxpose.xlu0.b32.cont [5/16] 0.0, 128
    %427 = vxpose.xlu0.b32.cont [6/16] 0.0, 128
    %428 = vxpose.xlu0.b32.cont [7/16] 0.0, 128
    %429 = vxpose.xlu0.b32.cont [8/16] 0.0, 128
    %430 = vxpose.xlu0.b32.cont [9/16] 0.0, 128
    %431 = vxpose.xlu0.b32.cont [10/16] 0.0, 128
    %432 = vxpose.xlu0.b32.cont [11/16] 0.0, 128
    %433 = vxpose.xlu0.b32.cont [12/16] 0.0, 128
    %434 = vxpose.xlu0.b32.cont [13/16] 0.0, 128
    %435 = vxpose.xlu0.b32.cont [14/16] 0.0, 128
    %436 = vxpose.xlu0.b32.cont [15/16] 0.0, 128
    %437 = vxpose.xlu0.b32.end [16/16] 0.0, 128
    %v438 = vpop.trf.xlu0
    %v439 = vpop.trf.xlu0
    %v440 = vpop.trf.xlu0
    %v441 = vpop.trf.xlu0
    %v442 = vpop.trf.xlu0
    %v443 = vpop.trf.xlu0
    %v444 = vpop.trf.xlu0
    %v445 = vpop.trf.xlu0
    %v446 = vpop.trf.xlu0
    %v447 = vpop.trf.xlu0
    %v448 = vpop.trf.xlu0
    %v449 = vpop.trf.xlu0
    %v450 = vpop.trf.xlu0
    %v451 = vpop.trf.xlu0
    %v452 = vpop.trf.xlu0
    %v453 = vpop.trf.xlu0
    %454 = vxpose.xlu0.b32.start [1/16] %v177, 128
    %455 = vxpose.xlu0.b32.cont [2/16] %v289, 128
    %456 = vxpose.xlu0.b32.cont [3/16] 0.0, 128
    %457 = vxpose.xlu0.b32.cont [4/16] 0.0, 128
    %458 = vxpose.xlu0.b32.cont [5/16] 0.0, 128
    %459 = vxpose.xlu0.b32.cont [6/16] 0.0, 128
    %460 = vxpose.xlu0.b32.cont [7/16] 0.0, 128
    %461 = vxpose.xlu0.b32.cont [8/16] 0.0, 128
    %462 = vxpose.xlu0.b32.cont [9/16] 0.0, 128
    %463 = vxpose.xlu0.b32.cont [10/16] 0.0, 128
    %464 = vxpose.xlu0.b32.cont [11/16] 0.0, 128
    %465 = vxpose.xlu0.b32.cont [12/16] 0.0, 128
    %466 = vxpose.xlu0.b32.cont [13/16] 0.0, 128
    %467 = vxpose.xlu0.b32.cont [14/16] 0.0, 128
    %468 = vxpose.xlu0.b32.cont [15/16] 0.0, 128
    %469 = vxpose.xlu0.b32.end [16/16] 0.0, 128
    %v470 = vpop.trf.xlu0
    %v471 = vpop.trf.xlu0
    %v472 = vpop.trf.xlu0
    %v473 = vpop.trf.xlu0
    %v474 = vpop.trf.xlu0
    %v475 = vpop.trf.xlu0
    %v476 = vpop.trf.xlu0
    %v477 = vpop.trf.xlu0
    %v478 = vpop.trf.xlu0
    %v479 = vpop.trf.xlu0
    %v480 = vpop.trf.xlu0
    %v481 = vpop.trf.xlu0
    %v482 = vpop.trf.xlu0
    %v483 = vpop.trf.xlu0
    %v484 = vpop.trf.xlu0
    %v485 = vpop.trf.xlu0
    %486 = vxpose.xlu0.b32.start [1/16] %v179, 128
    %487 = vxpose.xlu0.b32.cont [2/16] %v291, 128
    %488 = vxpose.xlu0.b32.cont [3/16] 0.0, 128
    %489 = vxpose.xlu0.b32.cont [4/16] 0.0, 128
    %490 = vxpose.xlu0.b32.cont [5/16] 0.0, 128
    %491 = vxpose.xlu0.b32.cont [6/16] 0.0, 128
    %492 = vxpose.xlu0.b32.cont [7/16] 0.0, 128
    %493 = vxpose.xlu0.b32.cont [8/16] 0.0, 128
    %494 = vxpose.xlu0.b32.cont [9/16] 0.0, 128
    %495 = vxpose.xlu0.b32.cont [10/16] 0.0, 128
    %496 = vxpose.xlu0.b32.cont [11/16] 0.0, 128
    %497 = vxpose.xlu0.b32.cont [12/16] 0.0, 128
    %498 = vxpose.xlu0.b32.cont [13/16] 0.0, 128
    %499 = vxpose.xlu0.b32.cont [14/16] 0.0, 128
    %500 = vxpose.xlu0.b32.cont [15/16] 0.0, 128
    %501 = vxpose.xlu0.b32.end [16/16] 0.0, 128
    %v502 = vpop.trf.xlu0
    %v503 = vpop.trf.xlu0
    %v504 = vpop.trf.xlu0
    %v505 = vpop.trf.xlu0
    %v506 = vpop.trf.xlu0
    %v507 = vpop.trf.xlu0
    %v508 = vpop.trf.xlu0
    %v509 = vpop.trf.xlu0
    %v510 = vpop.trf.xlu0
    %v511 = vpop.trf.xlu0
    %v512 = vpop.trf.xlu0
    %v513 = vpop.trf.xlu0
    %v514 = vpop.trf.xlu0
    %v515 = vpop.trf.xlu0
    %v516 = vpop.trf.xlu0
    %v517 = vpop.trf.xlu0
    %518 = vxpose.xlu0.b32.start [1/16] %v181, 128
    %519 = vxpose.xlu0.b32.cont [2/16] %v293, 128
    %520 = vxpose.xlu0.b32.cont [3/16] 0.0, 128
    %521 = vxpose.xlu0.b32.cont [4/16] 0.0, 128
    %522 = vxpose.xlu0.b32.cont [5/16] 0.0, 128
    %523 = vxpose.xlu0.b32.cont [6/16] 0.0, 128
    %524 = vxpose.xlu0.b32.cont [7/16] 0.0, 128
    %525 = vxpose.xlu0.b32.cont [8/16] 0.0, 128
    %526 = vxpose.xlu0.b32.cont [9/16] 0.0, 128
    %527 = vxpose.xlu0.b32.cont [10/16] 0.0, 128
    %528 = vxpose.xlu0.b32.cont [11/16] 0.0, 128
    %529 = vxpose.xlu0.b32.cont [12/16] 0.0, 128
    %530 = vxpose.xlu0.b32.cont [13/16] 0.0, 128
    %531 = vxpose.xlu0.b32.cont [14/16] 0.0, 128
    %532 = vxpose.xlu0.b32.cont [15/16] 0.0, 128
    %533 = vxpose.xlu0.b32.end [16/16] 0.0, 128
    %v534 = vpop.trf.xlu0
    %v535 = vpop.trf.xlu0
    %v536 = vpop.trf.xlu0
    %v537 = vpop.trf.xlu0
    %v538 = vpop.trf.xlu0
    %v539 = vpop.trf.xlu0
    %v540 = vpop.trf.xlu0
    %v541 = vpop.trf.xlu0
    %v542 = vpop.trf.xlu0
    %v543 = vpop.trf.xlu0
    %v544 = vpop.trf.xlu0
    %v545 = vpop.trf.xlu0
    %v546 = vpop.trf.xlu0
    %v547 = vpop.trf.xlu0
    %v548 = vpop.trf.xlu0
    %v549 = vpop.trf.xlu0
    %v550 = vrot.slane %v374, 4
    %v551 = vsel %vm70, %v550, %v310
    %v552 = vrot.slane %v310, 4
    %v553 = vsel %vm70, %v374, %v552
    %v555 = vunpack.c.l.s4 1983009808
    %v556 = vunpack.c.0.s8 %v555
    %v557 = vperm.slane %v551, %v556
    %v559 = vunpack.c.l.s4 1983009808
    %v560 = vunpack.c.0.s8 %v559
    %v561 = vperm.slane %v553, %v560
    %v562 = vrot.slane %v406, 4
    %v563 = vsel %vm70, %v562, %v342
    %v564 = vrot.slane %v342, 4
    %v565 = vsel %vm70, %v406, %v564
    %v567 = vunpack.c.l.s4 1983009808
    %v568 = vunpack.c.0.s8 %v567
    %v569 = vperm.slane %v563, %v568
    %v571 = vunpack.c.l.s4 1983009808
    %v572 = vunpack.c.0.s8 %v571
    %v573 = vperm.slane %v565, %v572
    %v574 = vrot.slane %v502, 4
    %v575 = vsel %vm70, %v574, %v438
    %v576 = vrot.slane %v438, 4
    %v577 = vsel %vm70, %v502, %v576
    %v579 = vunpack.c.l.s4 1983009808
    %v580 = vunpack.c.0.s8 %v579
    %v581 = vperm.slane %v575, %v580
    %v583 = vunpack.c.l.s4 1983009808
    %v584 = vunpack.c.0.s8 %v583
    %v585 = vperm.slane %v577, %v584
    %v586 = vrot.slane %v534, 4
    %v587 = vsel %vm70, %v586, %v470
    %v588 = vrot.slane %v470, 4
    %v589 = vsel %vm70, %v534, %v588
    %v591 = vunpack.c.l.s4 1983009808
    %v592 = vunpack.c.0.s8 %v591
    %v593 = vperm.slane %v587, %v592
    %v595 = vunpack.c.l.s4 1983009808
    %v596 = vunpack.c.0.s8 %v595
    %v597 = vperm.slane %v589, %v596
    %v598 = vrot.slane %v569, 4
    %v599 = vsel %vm70, %v598, %v557
    %v600 = vrot.slane %v557, 4
    %v601 = vsel %vm70, %v569, %v600
    %v603 = vunpack.c.l.s4 1934713408
    %v604 = vunpack.c.0.s8 %v603
    %v605 = vperm.slane %v599, %v604
    %v607 = vunpack.c.l.s4 1934713408
    %v608 = vunpack.c.0.s8 %v607
    %v609 = vperm.slane %v601, %v608
    %v610 = vrot.slane %v573, 4
    %v611 = vsel %vm70, %v610, %v561
    %v612 = vrot.slane %v561, 4
    %v613 = vsel %vm70, %v573, %v612
    %v615 = vunpack.c.l.s4 1934713408
    %v616 = vunpack.c.0.s8 %v615
    %v617 = vperm.slane %v611, %v616
    %v619 = vunpack.c.l.s4 1934713408
    %v620 = vunpack.c.0.s8 %v619
    %v621 = vperm.slane %v613, %v620
    %v622 = vrot.slane %v593, 4
    %v623 = vsel %vm70, %v622, %v581
    %v624 = vrot.slane %v581, 4
    %v625 = vsel %vm70, %v593, %v624
    %v627 = vunpack.c.l.s4 1934713408
    %v628 = vunpack.c.0.s8 %v627
    %v629 = vperm.slane %v623, %v628
    %v631 = vunpack.c.l.s4 1934713408
    %v632 = vunpack.c.0.s8 %v631
    %v633 = vperm.slane %v625, %v632
    %v634 = vrot.slane %v597, 4
    %v635 = vsel %vm70, %v634, %v585
    %v636 = vrot.slane %v585, 4
    %v637 = vsel %vm70, %v597, %v636
    %v639 = vunpack.c.l.s4 1934713408
    %v640 = vunpack.c.0.s8 %v639
    %v641 = vperm.slane %v635, %v640
    %v643 = vunpack.c.l.s4 1934713408
    %v644 = vunpack.c.0.s8 %v643
    %v645 = vperm.slane %v637, %v644
    %v646 = vrot.slane %v629, 4
    %v647 = vsel %vm70, %v646, %v605
    %v648 = vrot.slane %v605, 4
    %v649 = vsel %vm70, %v629, %v648
    %v650 = vrot.slane %v633, 4
    %v651 = vsel %vm70, %v650, %v609
    %v652 = vrot.slane %v609, 4
    %v653 = vsel %vm70, %v633, %v652
    %v654 = vrot.slane %v641, 4
    %v655 = vsel %vm70, %v654, %v617
    %v656 = vrot.slane %v617, 4
    %v657 = vsel %vm70, %v641, %v656
    %v658 = vrot.slane %v645, 4
    %v659 = vsel %vm70, %v658, %v621
    %v660 = vrot.slane %v621, 4
    %v661 = vsel %vm70, %v645, %v660
    %v662 = vrot.slane %v375, 4
    %v663 = vsel %vm70, %v662, %v311
    %v664 = vrot.slane %v311, 4
    %v665 = vsel %vm70, %v375, %v664
    %v667 = vunpack.c.l.s4 1983009808
    %v668 = vunpack.c.0.s8 %v667
    %v669 = vperm.slane %v663, %v668
    %v671 = vunpack.c.l.s4 1983009808
    %v672 = vunpack.c.0.s8 %v671
    %v673 = vperm.slane %v665, %v672
    %v674 = vrot.slane %v407, 4
    %v675 = vsel %vm70, %v674, %v343
    %v676 = vrot.slane %v343, 4
    %v677 = vsel %vm70, %v407, %v676
    %v679 = vunpack.c.l.s4 1983009808
    %v680 = vunpack.c.0.s8 %v679
    %v681 = vperm.slane %v675, %v680
    %v683 = vunpack.c.l.s4 1983009808
    %v684 = vunpack.c.0.s8 %v683
    %v685 = vperm.slane %v677, %v684
    %v686 = vrot.slane %v503, 4
    %v687 = vsel %vm70, %v686, %v439
    %v688 = vrot.slane %v439, 4
    %v689 = vsel %vm70, %v503, %v688
    %v691 = vunpack.c.l.s4 1983009808
    %v692 = vunpack.c.0.s8 %v691
    %v693 = vperm.slane %v687, %v692
    %v695 = vunpack.c.l.s4 1983009808
    %v696 = vunpack.c.0.s8 %v695
    %v697 = vperm.slane %v689, %v696
    %v698 = vrot.slane %v535, 4
    %v699 = vsel %vm70, %v698, %v471
    %v700 = vrot.slane %v471, 4
    %v701 = vsel %vm70, %v535, %v700
    %v703 = vunpack.c.l.s4 1983009808
    %v704 = vunpack.c.0.s8 %v703
    %v705 = vperm.slane %v699, %v704
    %v707 = vunpack.c.l.s4 1983009808
    %v708 = vunpack.c.0.s8 %v707
    %v709 = vperm.slane %v701, %v708
    %v710 = vrot.slane %v681, 4
    %v711 = vsel %vm70, %v710, %v669
    %v712 = vrot.slane %v669, 4
    %v713 = vsel %vm70, %v681, %v712
    %v715 = vunpack.c.l.s4 1934713408
    %v716 = vunpack.c.0.s8 %v715
    %v717 = vperm.slane %v711, %v716
    %v719 = vunpack.c.l.s4 1934713408
    %v720 = vunpack.c.0.s8 %v719
    %v721 = vperm.slane %v713, %v720
    %v722 = vrot.slane %v685, 4
    %v723 = vsel %vm70, %v722, %v673
    %v724 = vrot.slane %v673, 4
    %v725 = vsel %vm70, %v685, %v724
    %v727 = vunpack.c.l.s4 1934713408
    %v728 = vunpack.c.0.s8 %v727
    %v729 = vperm.slane %v723, %v728
    %v731 = vunpack.c.l.s4 1934713408
    %v732 = vunpack.c.0.s8 %v731
    %v733 = vperm.slane %v725, %v732
    %v734 = vrot.slane %v705, 4
    %v735 = vsel %vm70, %v734, %v693
    %v736 = vrot.slane %v693, 4
    %v737 = vsel %vm70, %v705, %v736
    %v739 = vunpack.c.l.s4 1934713408
    %v740 = vunpack.c.0.s8 %v739
    %v741 = vperm.slane %v735, %v740
    %v743 = vunpack.c.l.s4 1934713408
    %v744 = vunpack.c.0.s8 %v743
    %v745 = vperm.slane %v737, %v744
    %v746 = vrot.slane %v709, 4
    %v747 = vsel %vm70, %v746, %v697
    %v748 = vrot.slane %v697, 4
    %v749 = vsel %vm70, %v709, %v748
    %v751 = vunpack.c.l.s4 1934713408
    %v752 = vunpack.c.0.s8 %v751
    %v753 = vperm.slane %v747, %v752
    %v755 = vunpack.c.l.s4 1934713408
    %v756 = vunpack.c.0.s8 %v755
    %v757 = vperm.slane %v749, %v756
    %v758 = vrot.slane %v741, 4
    %v759 = vsel %vm70, %v758, %v717
    %v760 = vrot.slane %v717, 4
    %v761 = vsel %vm70, %v741, %v760
    %v762 = vrot.slane %v745, 4
    %v763 = vsel %vm70, %v762, %v721
    %v764 = vrot.slane %v721, 4
    %v765 = vsel %vm70, %v745, %v764
    %v766 = vrot.slane %v753, 4
    %v767 = vsel %vm70, %v766, %v729
    %v768 = vrot.slane %v729, 4
    %v769 = vsel %vm70, %v753, %v768
    %v770 = vrot.slane %v757, 4
    %v771 = vsel %vm70, %v770, %v733
    %v772 = vrot.slane %v733, 4
    %v773 = vsel %vm70, %v757, %v772
    %775 = vrot.lane.b32.xlu0 %v649, 16
    %v776 = vpop.permute.xlu0 %775
    %779 = vrot.lane.b32.xlu0 %v651, 32
    %v780 = vpop.permute.xlu0 %779
    %783 = vrot.lane.b32.xlu0 %v653, 48
    %v784 = vpop.permute.xlu0 %783
    %787 = vrot.lane.b32.xlu0 %v655, 64
    %v788 = vpop.permute.xlu0 %787
    %791 = vrot.lane.b32.xlu0 %v657, 80
    %v792 = vpop.permute.xlu0 %791
    %795 = vrot.lane.b32.xlu0 %v659, 96
    %v796 = vpop.permute.xlu0 %795
    %799 = vrot.lane.b32.xlu0 %v661, 112
    %v800 = vpop.permute.xlu0 %799
    %803 = vrot.lane.b32.xlu0 %v761, 16
    %v804 = vpop.permute.xlu0 %803
    %807 = vrot.lane.b32.xlu0 %v763, 32
    %v808 = vpop.permute.xlu0 %807
    %811 = vrot.lane.b32.xlu0 %v765, 48
    %v812 = vpop.permute.xlu0 %811
    %815 = vrot.lane.b32.xlu0 %v767, 64
    %v816 = vpop.permute.xlu0 %815
    %819 = vrot.lane.b32.xlu0 %v769, 80
    %v820 = vpop.permute.xlu0 %819
    %823 = vrot.lane.b32.xlu0 %v771, 96
    %v824 = vpop.permute.xlu0 %823
    %827 = vrot.lane.b32.xlu0 %v773, 112
    %v828 = vpop.permute.xlu0 %827
    %vm830 = vcmask 130048
    %v831 = vsel %vm830, %v647, %v776
    %vm832 = vcmask 261120
    %v833 = vsel %vm832, %v831, %v780
    %vm834 = vcmask 392192
    %v835 = vsel %vm834, %v833, %v784
    %vm836 = vcmask 523264
    %v837 = vsel %vm836, %v835, %v788
    %vm838 = vcmask 654336
    %v839 = vsel %vm838, %v837, %v792
    %vm840 = vcmask 785408
    %v841 = vsel %vm840, %v839, %v796
    %vm842 = vcmask 916480
    %v843 = vsel %vm842, %v841, %v800
    %v844 = vsel %vm830, %v759, %v804
    %v845 = vsel %vm832, %v844, %v808
    %v846 = vsel %vm834, %v845, %v812
    %v847 = vsel %vm836, %v846, %v816
    %v848 = vsel %vm838, %v847, %v820
    %v849 = vsel %vm840, %v848, %v824
    %v850 = vsel %vm842, %v849, %v828
    %851 = vst [vmem:[#allocation5] sm:$0xff] %v843
    %852 = vst [vmem:[#allocation5 + $0x8] sm:$0xff] %v850
    // Predicated region
    $region10: #{tpu_custom_call.1} parent=1 // pred_check
      _
    $region11: #{tpu_custom_call.1} parent=1 // pred_check_branch
      %854 = sbr.rel (0) target = $region13
    $region12: #{tpu_custom_call.1} parent=1 // pred_region
      %856 = vsyncadd [#allocation4], 0
      %s858 = sshll.u32 [#allocation5], 4
      %s859 = int_to_ptr.vmem [resolvable:$true] %s858
      %s860 = sshll.u32 %s1, 4
      %s861 = int_to_ptr.hbm [resolvable:$true] %s860
      %863 = dma.vmem_to_hbm [thread:$0]  %s859, 256, %s861, [#allocation4]
    $region13: #{tpu_custom_call.1} parent=1 // pred_fallthru
      _
    // Predicated region
    $region14: #{tpu_custom_call.1} parent=1 // pred_check
      _
    $region15: #{tpu_custom_call.1} parent=1 // pred_check_branch
      %865 = sbr.rel (0) target = $region17
    $region16: #{tpu_custom_call.1} parent=1 // pred_region
      %867 = dma.done [#allocation4], 256
    $region17: #{tpu_custom_call.1} parent=1 // pred_fallthru
      _
    %868 = vsyncpa [#allocation3], 1
    %869 = vsyncpa [#allocation4], 1

// kernel: tpu_custom_call.1
$region0: #{tpu_custom_call.1}
  #allocation0 [shape = 'u32[]', space=smem, size = 0x4, offset = 0x4, fixed_abs, tag = 'smem constant byte address 0x4 - core index']
  #allocation1 [shape = 'u32[72,128]{1,0:T(1,128)}', space=vmem, size = 0x9000, scoped, tag = 'internal scratch']
  %s0 = inlined_call_operand.hbm [shape: f32[8,16,16], index: 0, kind: input, shape index: {}]
  %s1 = inlined_call_operand.hbm [shape: f32[8,16,16], index: 1, kind: output, shape index: {}]
  %s2 = sld [smem:[#allocation0]]
  $region41: #{tpu_custom_call.1} parent=0
    _
  %s4 = ssub.s32 1, %s2
  %s5 = scalar_select 0, %s4, %s2
  $region1: #{tpu_custom_call.1} parent=0
    #allocation2 [shape = 'u8[65536]{0}', space=vmem, size = 0x10000, scoped, tag = 'input window, operand 0']
    #allocation3 [shape = 's32[2]{0}', space=sflag, size = 0x8, scoped, tag = 'scoped memory for tpu_custom_call.1']
    #allocation4 [shape = 's32[2]{0}', space=sflag, size = 0x8, scoped, tag = 'scoped memory for tpu_custom_call.1']
    #allocation5 [shape = 'u8[65536]{0}', space=vmem, size = 0x10000, scoped, tag = 'output window, operand 0']
    %6 = vsyncpa [#allocation3], 0
    %s7 = scalar_lea.sflag [#allocation3], 1
    %8 = vsyncpa %s7, 0
    %9 = vsyncpa [#allocation4], 0
    %s10 = scalar_lea.sflag [#allocation4], 1
    %11 = vsyncpa %s10, 0
    loop: start=0, step=1, limit=4
    $region2: #{tpu_custom_call.1} parent=1 // loop_pre_header
      _
    $region3: #{tpu_custom_call.1} parent=1 // loop_header
      %s13 = sphi 0, %s17
      %p14 = scmp.ge.s32.totalorder %s13, 4
      %s23 = sphi 0, %s25
      %s26 = sphi 0, %s23
      %s27 = sphi 0, %s26
      %s43 = sphi 0, %s27
      %s49 = sphi 0, %s51
      %s52 = sphi 0, %s49
      %s53 = sphi 0, %s52
      %s69 = sphi 0, %s53
    $region4: #{tpu_custom_call.1} parent=1 // loop_header_branch
      %16 = sbr.rel (%p14) target = $region8
    $region5: #{tpu_custom_call.1} parent=1 // loop_body
      %s18 = ssub.s32 %s13, 1
      %s19 = ssub.s32 %s13, 2
      %s20 = sadd.s32 %s13, 1
      %s21 = ssub.s32 %s13, %s20
      %p22 = scmp.eq.s32.totalorder %s21, 0
      %s24 = sadd.s32 %s23, 1
      %s25 = scalar_select %p22, %s23, %s24
      %p28 = pneg %p22
      %p29 = scmp.eq.s32.totalorder %s13, 1
      %p30 = por %p28, %p29
      %p31 = scmp.ne.s32.totalorder %s23, %s26
      %p32 = scmp.eq.s32.totalorder %s13, 0
      %p33 = por %p31, %p32
      %p34 = scmp.ne.s32.totalorder %s23, %s26
      %p35 = scmp.eq.s32.totalorder %s18, 1
      %p36 = por %p34, %p35
      %p37 = scmp.ne.s32.totalorder %s26, %s27
      %p38 = scmp.eq.s32.totalorder %s18, 0
      %p39 = por %p37, %p38
      %p40 = scmp.ne.s32.totalorder %s26, %s27
      %p41 = scmp.eq.s32.totalorder %s19, 1
      %p42 = por %p40, %p41
      %p44 = scmp.ne.s32.totalorder %s27, %s43
      %p45 = scmp.eq.s32.totalorder %s19, 0
      %p46 = por %p44, %p45
      %s47 = ssub.s32 %s13, %s20
      %p48 = scmp.eq.s32.totalorder %s47, 0
      %s50 = sadd.s32 %s49, 1
      %s51 = scalar_select %p48, %s49, %s50
      %p54 = pneg %p48
      %p55 = scmp.eq.s32.totalorder %s13, 1
      %p56 = por %p54, %p55
      %p57 = scmp.ne.s32.totalorder %s49, %s52
      %p58 = scmp.eq.s32.totalorder %s13, 0
      %p59 = por %p57, %p58
      %p60 = scmp.ne.s32.totalorder %s49, %s52
      %p61 = scmp.eq.s32.totalorder %s18, 1
      %p62 = por %p60, %p61
      %p63 = scmp.ne.s32.totalorder %s52, %s53
      %p64 = scmp.eq.s32.totalorder %s18, 0
      %p65 = por %p63, %p64
      %p66 = scmp.ne.s32.totalorder %s52, %s53
      %p67 = scmp.eq.s32.totalorder %s19, 1
      %p68 = por %p66, %p67
      %p70 = scmp.ne.s32.totalorder %s53, %s69
      %p71 = scmp.eq.s32.totalorder %s19, 0
      %p72 = por %p70, %p71
      %p73 = scmp.le.s32.totalorder 1, %s13
      %p74 = scmp.lt.s32.totalorder %s13, 3
      %p75 = pnand %p73, %p74
      %p76 = pneg %p75
      // Predicated region
      $region9: #{tpu_custom_call.1} parent=5 // pred_check
        _
      $region10: #{tpu_custom_call.1} parent=5 // pred_check_branch
        %78 = sbr.rel (%p75) target = $region12
      $region11: #{tpu_custom_call.1} parent=5 // pred_region
        %s79 = ssub.s32 %s13, 1
      $region12: #{tpu_custom_call.1} parent=5 // pred_fallthru
        _
      %p80 = scmp.lt.s32.totalorder %s13, 2
      // Predicated region
      $region13: #{tpu_custom_call.1} parent=5 // pred_check
        %p81 = pneg %p80
      $region14: #{tpu_custom_call.1} parent=5 // pred_check_branch
        %83 = sbr.rel (%p81) target = $region16
      $region15: #{tpu_custom_call.1} parent=5 // pred_region
        // Predicated region
        $region17: #{tpu_custom_call.1} parent=15 // pred_check
          %p84 = pneg %p33
        $region18: #{tpu_custom_call.1} parent=15 // pred_check_branch
          %86 = sbr.rel (%p84) target = $region20
        $region19: #{tpu_custom_call.1} parent=15 // pred_region
          %s87 = sand.u32 %s23, 1
          %s88 = scalar_lea.sflag [#allocation3], %s87
          %s89 = sand.u32 %s23, 1
          %s90 = smul.addr %s89, 64
          %s91 = scalar_lea.vmem [#allocation2], %s90
          %s92 = smul.u32 4, %s13
          %94 = vsyncadd %s88, 0
          %s95 = smul.addr %s92, 2
          %s96 = smul.addr %s95, 8
          %s97 = scalar_lea.hbm %s0, %s96
          %s98 = sshll.u32 %s97, 4
          %s99 = int_to_ptr.hbm [resolvable:$true] %s98
          %s100 = sshll.u32 %s91, 4
          %s101 = int_to_ptr.vmem [resolvable:$true] %s100
          %106 = dma.hbm_to_vmem [thread:$0]  %s99, 1024, %s101, %s88, 128, 128, 8
        $region20: #{tpu_custom_call.1} parent=15 // pred_fallthru
          _
      $region16: #{tpu_custom_call.1} parent=5 // pred_fallthru
        _
      %p107 = scmp.le.s32.totalorder 1, %s13
      %p108 = scmp.lt.s32.totalorder %s13, 3
      %p109 = pnand %p107, %p108
      %p110 = pneg %p109
      // Predicated region
      $region21: #{tpu_custom_call.1} parent=5 // pred_check
        _
      $region22: #{tpu_custom_call.1} parent=5 // pred_check_branch
        %112 = sbr.rel (%p109) target = $region24
      $region23: #{tpu_custom_call.1} parent=5 // pred_region
        %s113 = ssub.s32 %s13, 1
        %s114 = sand.u32 %s26, 1
        %s115 = scalar_lea.sflag [#allocation3], %s114
        %s116 = sand.u32 %s26, 1
        %s117 = smul.addr %s116, 64
        %s118 = scalar_lea.vmem [#allocation2], %s117
        // Predicated region
        $region25: #{tpu_custom_call.1} parent=23 // pred_check
          %p119 = pneg %p39
        $region26: #{tpu_custom_call.1} parent=23 // pred_check_branch
          %121 = sbr.rel (%p119) target = $region28
        $region27: #{tpu_custom_call.1} parent=23 // pred_region
          %123 = dma.done %s115, 1024
        $region28: #{tpu_custom_call.1} parent=23 // pred_fallthru
          _
        %s124 = sand.u32 %s26, 1
        %s125 = scalar_lea.sflag [#allocation3], %s124
        %s126 = sand.u32 %s26, 1
        %s127 = smul.addr %s126, 64
        %s128 = scalar_lea.vmem [#allocation2], %s127
        %p129 = pneg %p39
        %p130 = pneg %p36
        %p131 = pneg %p65
        %p132 = pneg %p62
        %s133 = sand.u32 %s52, 1
        %s134 = scalar_lea.sflag [#allocation4], %s133
        %s135 = sand.u32 %s52, 1
        %s136 = smul.addr %s135, 64
        %s137 = scalar_lea.vmem [#allocation5], %s136
        %s138 = smul.u32 4, %s18
        %s139 = smul.u32 4, %s18
        %v140 = vld [vmem:[%s118] sm:$0xff]
        %v141 = vld [vmem:[%s118 + $0x8] sm:$0xff]
        %v142 = vld [vmem:[%s118 + $0x10] sm:$0xff]
        %v143 = vld [vmem:[%s118 + $0x18] sm:$0xff]
        %v144 = vld [vmem:[%s118 + $0x20] sm:$0xff]
        %v145 = vld [vmem:[%s118 + $0x28] sm:$0xff]
        %v146 = vld [vmem:[%s118 + $0x30] sm:$0xff]
        %v147 = vld [vmem:[%s118 + $0x38] sm:$0xff]
        %148 = vxpose.xlu0.b32.start [1/16] %v140, 128
        %149 = vxpose.xlu0.b32.cont [2/16] %v141, 128
        %150 = vxpose.xlu0.b32.cont [3/16] 0.0, 128
        %151 = vxpose.xlu0.b32.cont [4/16] 0.0, 128
        %152 = vxpose.xlu0.b32.cont [5/16] 0.0, 128
        %153 = vxpose.xlu0.b32.cont [6/16] 0.0, 128
        %154 = vxpose.xlu0.b32.cont [7/16] 0.0, 128
        %155 = vxpose.xlu0.b32.cont [8/16] 0.0, 128
        %156 = vxpose.xlu0.b32.cont [9/16] 0.0, 128
        %157 = vxpose.xlu0.b32.cont [10/16] 0.0, 128
        %158 = vxpose.xlu0.b32.cont [11/16] 0.0, 128
        %159 = vxpose.xlu0.b32.cont [12/16] 0.0, 128
        %160 = vxpose.xlu0.b32.cont [13/16] 0.0, 128
        %161 = vxpose.xlu0.b32.cont [14/16] 0.0, 128
        %162 = vxpose.xlu0.b32.cont [15/16] 0.0, 128
        %163 = vxpose.xlu0.b32.end [16/16] 0.0, 128
        %v164 = vpop.trf.xlu0
        %v165 = vpop.trf.xlu0
        %v166 = vpop.trf.xlu0
        %v167 = vpop.trf.xlu0
        %v168 = vpop.trf.xlu0
        %v169 = vpop.trf.xlu0
        %v170 = vpop.trf.xlu0
        %v171 = vpop.trf.xlu0
        %v172 = vpop.trf.xlu0
        %v173 = vpop.trf.xlu0
        %v174 = vpop.trf.xlu0
        %v175 = vpop.trf.xlu0
        %v176 = vpop.trf.xlu0
        %v177 = vpop.trf.xlu0
        %v178 = vpop.trf.xlu0
        %v179 = vpop.trf.xlu0
        %180 = vxpose.xlu0.b32.start [1/16] %v142, 128
        %181 = vxpose.xlu0.b32.cont [2/16] %v143, 128
        %182 = vxpose.xlu0.b32.cont [3/16] 0.0, 128
        %183 = vxpose.xlu0.b32.cont [4/16] 0.0, 128
        %184 = vxpose.xlu0.b32.cont [5/16] 0.0, 128
        %185 = vxpose.xlu0.b32.cont [6/16] 0.0, 128
        %186 = vxpose.xlu0.b32.cont [7/16] 0.0, 128
        %187 = vxpose.xlu0.b32.cont [8/16] 0.0, 128
        %188 = vxpose.xlu0.b32.cont [9/16] 0.0, 128
        %189 = vxpose.xlu0.b32.cont [10/16] 0.0, 128
        %190 = vxpose.xlu0.b32.cont [11/16] 0.0, 128
        %191 = vxpose.xlu0.b32.cont [12/16] 0.0, 128
        %192 = vxpose.xlu0.b32.cont [13/16] 0.0, 128
        %193 = vxpose.xlu0.b32.cont [14/16] 0.0, 128
        %194 = vxpose.xlu0.b32.cont [15/16] 0.0, 128
        %195 = vxpose.xlu0.b32.end [16/16] 0.0, 128
        %v196 = vpop.trf.xlu0
        %v197 = vpop.trf.xlu0
        %v198 = vpop.trf.xlu0
        %v199 = vpop.trf.xlu0
        %v200 = vpop.trf.xlu0
        %v201 = vpop.trf.xlu0
        %v202 = vpop.trf.xlu0
        %v203 = vpop.trf.xlu0
        %v204 = vpop.trf.xlu0
        %v205 = vpop.trf.xlu0
        %v206 = vpop.trf.xlu0
        %v207 = vpop.trf.xlu0
        %v208 = vpop.trf.xlu0
        %v209 = vpop.trf.xlu0
        %v210 = vpop.trf.xlu0
        %v211 = vpop.trf.xlu0
        %212 = vxpose.xlu0.b32.start [1/16] %v144, 128
        %213 = vxpose.xlu0.b32.cont [2/16] %v145, 128
        %214 = vxpose.xlu0.b32.cont [3/16] 0.0, 128
        %215 = vxpose.xlu0.b32.cont [4/16] 0.0, 128
        %216 = vxpose.xlu0.b32.cont [5/16] 0.0, 128
        %217 = vxpose.xlu0.b32.cont [6/16] 0.0, 128
        %218 = vxpose.xlu0.b32.cont [7/16] 0.0, 128
        %219 = vxpose.xlu0.b32.cont [8/16] 0.0, 128
        %220 = vxpose.xlu0.b32.cont [9/16] 0.0, 128
        %221 = vxpose.xlu0.b32.cont [10/16] 0.0, 128
        %222 = vxpose.xlu0.b32.cont [11/16] 0.0, 128
        %223 = vxpose.xlu0.b32.cont [12/16] 0.0, 128
        %224 = vxpose.xlu0.b32.cont [13/16] 0.0, 128
        %225 = vxpose.xlu0.b32.cont [14/16] 0.0, 128
        %226 = vxpose.xlu0.b32.cont [15/16] 0.0, 128
        %227 = vxpose.xlu0.b32.end [16/16] 0.0, 128
        %v228 = vpop.trf.xlu0
        %v229 = vpop.trf.xlu0
        %v230 = vpop.trf.xlu0
        %v231 = vpop.trf.xlu0
        %v232 = vpop.trf.xlu0
        %v233 = vpop.trf.xlu0
        %v234 = vpop.trf.xlu0
        %v235 = vpop.trf.xlu0
        %v236 = vpop.trf.xlu0
        %v237 = vpop.trf.xlu0
        %v238 = vpop.trf.xlu0
        %v239 = vpop.trf.xlu0
        %v240 = vpop.trf.xlu0
        %v241 = vpop.trf.xlu0
        %v242 = vpop.trf.xlu0
        %v243 = vpop.trf.xlu0
        %244 = vxpose.xlu0.b32.start [1/16] %v146, 128
        %245 = vxpose.xlu0.b32.cont [2/16] %v147, 128
        %246 = vxpose.xlu0.b32.cont [3/16] 0.0, 128
        %247 = vxpose.xlu0.b32.cont [4/16] 0.0, 128
        %248 = vxpose.xlu0.b32.cont [5/16] 0.0, 128
        %249 = vxpose.xlu0.b32.cont [6/16] 0.0, 128
        %250 = vxpose.xlu0.b32.cont [7/16] 0.0, 128
        %251 = vxpose.xlu0.b32.cont [8/16] 0.0, 128
        %252 = vxpose.xlu0.b32.cont [9/16] 0.0, 128
        %253 = vxpose.xlu0.b32.cont [10/16] 0.0, 128
        %254 = vxpose.xlu0.b32.cont [11/16] 0.0, 128
        %255 = vxpose.xlu0.b32.cont [12/16] 0.0, 128
        %256 = vxpose.xlu0.b32.cont [13/16] 0.0, 128
        %257 = vxpose.xlu0.b32.cont [14/16] 0.0, 128
        %258 = vxpose.xlu0.b32.cont [15/16] 0.0, 128
        %259 = vxpose.xlu0.b32.end [16/16] 0.0, 128
        %v260 = vpop.trf.xlu0
        %v261 = vpop.trf.xlu0
        %v262 = vpop.trf.xlu0
        %v263 = vpop.trf.xlu0
        %v264 = vpop.trf.xlu0
        %v265 = vpop.trf.xlu0
        %v266 = vpop.trf.xlu0
        %v267 = vpop.trf.xlu0
        %v268 = vpop.trf.xlu0
        %v269 = vpop.trf.xlu0
        %v270 = vpop.trf.xlu0
        %v271 = vpop.trf.xlu0
        %v272 = vpop.trf.xlu0
        %v273 = vpop.trf.xlu0
        %v274 = vpop.trf.xlu0
        %v275 = vpop.trf.xlu0
        %vm276 = vcmask 130048
        %277 = vst.msk [vmem:[%s137] sm:$0xff] %vm276, %v164
        %278 = vst.msk [vmem:[%s137 + $0x8] sm:$0xff] %vm276, %v165
        %279 = vst.msk [vmem:[%s137 + $0x10] sm:$0xff] %vm276, %v196
        %280 = vst.msk [vmem:[%s137 + $0x18] sm:$0xff] %vm276, %v197
        %281 = vst.msk [vmem:[%s137 + $0x20] sm:$0xff] %vm276, %v228
        %282 = vst.msk [vmem:[%s137 + $0x28] sm:$0xff] %vm276, %v229
        %283 = vst.msk [vmem:[%s137 + $0x30] sm:$0xff] %vm276, %v260
        %284 = vst.msk [vmem:[%s137 + $0x38] sm:$0xff] %vm276, %v261
        %s285 = sand.u32 %s52, 1
        %s286 = scalar_lea.sflag [#allocation4], %s285
        %s287 = sand.u32 %s52, 1
        %s288 = smul.addr %s287, 64
        %s289 = scalar_lea.vmem [#allocation5], %s288
        // Predicated region
        $region29: #{tpu_custom_call.1} parent=23 // pred_check
          %p290 = pneg %p62
        $region30: #{tpu_custom_call.1} parent=23 // pred_check_branch
          %292 = sbr.rel (%p290) target = $region32
        $region31: #{tpu_custom_call.1} parent=23 // pred_region
          %s293 = smul.u32 4, %s18
          %295 = vsyncadd %s286, 0
          %s296 = smul.addr %s293, 2
          %s297 = smul.addr %s296, 8
          %s298 = scalar_lea.hbm %s1, %s297
          %s299 = sshll.u32 %s289, 4
          %s300 = int_to_ptr.vmem [resolvable:$true] %s299
          %s301 = sshll.u32 %s298, 4
          %s302 = int_to_ptr.hbm [resolvable:$true] %s301
          %307 = dma.vmem_to_hbm [thread:$0]  %s300, 1024, %s302, %s286, 128, 128, 8
        $region32: #{tpu_custom_call.1} parent=23 // pred_fallthru
          _
      $region24: #{tpu_custom_call.1} parent=5 // pred_fallthru
        _
      %p308 = scmp.le.s32.totalorder 2, %s13
      // Predicated region
      $region33: #{tpu_custom_call.1} parent=5 // pred_check
        %p309 = pneg %p308
      $region34: #{tpu_custom_call.1} parent=5 // pred_check_branch
        %311 = sbr.rel (%p309) target = $region36
      $region35: #{tpu_custom_call.1} parent=5 // pred_region
        %s312 = ssub.s32 %s13, 2
        // Predicated region
        $region37: #{tpu_custom_call.1} parent=35 // pred_check
          %p313 = pneg %p68
        $region38: #{tpu_custom_call.1} parent=35 // pred_check_branch
          %315 = sbr.rel (%p313) target = $region40
        $region39: #{tpu_custom_call.1} parent=35 // pred_region
          %s316 = sand.u32 %s53, 1
          %s317 = scalar_lea.sflag [#allocation4], %s316
          %s318 = sand.u32 %s53, 1
          %s319 = smul.addr %s318, 64
          %s320 = scalar_lea.vmem [#allocation5], %s319
          %322 = dma.done %s317, 1024
        $region40: #{tpu_custom_call.1} parent=35 // pred_fallthru
          _
      $region36: #{tpu_custom_call.1} parent=5 // pred_fallthru
        _
    $region6: #{tpu_custom_call.1} parent=1 // loop_footer
      %s17 = sadd.s32 1, %s13
    $region7: #{tpu_custom_call.1} parent=1 // loop_footer_branch
      %12 = sbr.rel target = $region3
    $region8: #{tpu_custom_call.1} parent=1 // loop_exit
      _
    %323 = vsyncpa [#allocation3], 1
    %s324 = scalar_lea.sflag [#allocation3], 1
    %325 = vsyncpa %s324, 1
    %326 = vsyncpa [#allocation4], 1
    %s327 = scalar_lea.sflag [#allocation4], 1
    %328 = vsyncpa %s327, 1

</llo_original>
